<compile_context>
chip_gen: v6e
topology: v6e:2x2x1
jax: 0.10.0
libtpu: 0.0.40
codegen_flags: <defaults>
</compile_context>

<pallas_src>
import math
import numpy as np
import jax
import jax.numpy as jnp
from jax import lax
from jax.experimental import pallas as pl
from jax.experimental.pallas import tpu as pltpu


def _wave_pool_kernel(x_ref, o_ref):
    # x_ref: (2, TRG, KF)  -- [0] even-indexed node rows, [1] odd-indexed rows,
    #                         k pooled-row groups packed along the lane axis.
    # o_ref: (TRG, KFh)    -- KFh = KF // 2, a multiple of 128 (lane-dense).
    s = x_ref[0] + x_ref[1]                                  # node-pair sum (VPU)
    kf = x_ref.shape[-1]
    kfh = o_ref.shape[-1]
    # Feature-pair averaging matrix built in-register (no HBM traffic):
    # pf[i, j] = 0.25 iff i in {2j, 2j+1}; the 0.25 folds the 2x2-mean scale,
    # and the formula is automatically block-diagonal over the k lane groups.
    rows = lax.broadcasted_iota(jnp.int32, (kf, kfh), 0)
    cols = lax.broadcasted_iota(jnp.int32, (kf, kfh), 1)
    pf = jnp.where((rows == 2 * cols) | (rows == 2 * cols + 1),
                   0.25, 0.0).astype(s.dtype)
    o_ref[...] = jnp.dot(s, pf,
                         preferred_element_type=jnp.float32).astype(o_ref.dtype)


def avg_pool2x2_rows(x_eo_packed, kfh, trg, vmem_limit_bytes):
    """Pallas hot path: 2x2 average pool over (nodes, features), lane-packed.

    x_eo_packed: (2, Rg_pad, KF) even/odd node rows; each packed row holds k
                 consecutive pooled-row groups along the lane axis.
    Returns (Rg_pad, KFh) with KFh = KF // 2.
    """
    _, rg_pad, kf = x_eo_packed.shape
    return pl.pallas_call(
        _wave_pool_kernel,
        out_shape=jax.ShapeDtypeStruct((rg_pad, kfh), x_eo_packed.dtype),
        grid_spec=pltpu.PrefetchScalarGridSpec(
            num_scalar_prefetch=0,
            grid=(rg_pad // trg,),
            in_specs=[pl.BlockSpec((2, trg, kf), lambda g: (0, g, 0))],
            out_specs=pl.BlockSpec((trg, kfh), lambda g: (g, 0)),
        ),
        compiler_params=pltpu.CompilerParams(
            dimension_semantics=("parallel",),
            vmem_limit_bytes=int(vmem_limit_bytes)),
    )(x_eo_packed)


def wave_pool(x, edge_index, edge_attr, batch):
    """Reproduces WavePool.forward semantics."""
    x = jnp.asarray(x)
    batch_np = np.asarray(batch)
    N, F_in = x.shape
    F_use = (F_in // 2) * 2                 # avg_pool2d(2) floors the feature dim
    Fh = F_use // 2
    B = int(batch_np.max()) + 1 if N > 0 else 0
    num_nodes = np.bincount(batch_np, minlength=B) if B > 0 else np.zeros(0, np.int64)
    M = int(num_nodes.max()) if B > 0 else 0
    Mh = M // 2                             # avg_pool2d(2) floors the node dim
    R = B * Mh                              # pooled rows of the dense batch

    if R > 0 and Fh > 0:
        # ---- lane packing: k pooled rows per packed row so the output block
        #      width is a multiple of 128 lanes (unmasked stores) ----
        k = 128 // math.gcd(Fh, 128)
        KF, KFh = k * F_use, k * Fh
        Rg = -(-R // k)                     # packed row-groups needed

        itemsize = np.dtype(x.dtype).itemsize
        per_group = 2 * (2 * KF + KFh) * itemsize      # dbl-buffered in + out
        budget = 24 << 20                              # headroom on v7x (64 MiB VMEM)
        trg = min(1024, max(8, budget // max(per_group, 1)))
        if Rg > 16:                                    # >=2 grid steps -> both v7x TCs
            trg = min(trg, -(-Rg // 2))
        trg = min(trg, -(-Rg // 8) * 8)                # don't over-pad tiny inputs
        trg = max(8, (trg // 8) * 8)
        Rg_pad = -(-Rg // trg) * trg
        R_pad = Rg_pad * k
        footprint = 2 * trg * (2 * KF + KFh) * itemsize + KF * KFh * 4
        vmem_limit = int(min(60 << 20, max(footprint + (4 << 20), 16 << 20)))

        # ---- host-precomputed gather table: (2, R_pad) source node indices;
        #      index N points at a zero pad row (missing / padded slots) ----
        cum = np.concatenate([[0], np.cumsum(num_nodes)[:-1]])
        b_idx = np.repeat(np.arange(B), Mh)            # (R,)
        h_idx = np.tile(np.arange(Mh), B)              # (R,)
        src = np.full((2, R_pad), N, dtype=np.int32)
        for p in (0, 1):
            pos = 2 * h_idx + p
            valid = pos < num_nodes[b_idx]
            src[p, :R] = np.where(valid, cum[b_idx] + pos, N)

        # pooled rows to keep: even-indexed source slot holds a real node
        keep_idx = np.nonzero(2 * h_idx < num_nodes[b_idx])[0].astype(np.int32)

        # ---- device: gather -> Pallas pool -> gather-compact (no D2H) ----
        x_pad = jnp.concatenate(
            [x[:, :F_use], jnp.zeros((1, F_use), x.dtype)], axis=0)
        x_eo = jnp.take(x_pad, jnp.asarray(src), axis=0)        # (2, R_pad, F_use)
        x_eo = x_eo.reshape(2, Rg_pad, KF)                      # free row-major view
        pooled = avg_pool2x2_rows(x_eo, KFh, trg, vmem_limit)   # (Rg_pad, KFh)
        pooled = pooled.reshape(Rg_pad * k, Fh)
        x_pooled = jnp.take(pooled, jnp.asarray(keep_idx), axis=0)
        n_pool = int(keep_idx.shape[0])
    else:
        x_pooled = jnp.zeros((0, Fh), x.dtype)
        n_pool = 0

    # ---- edge pooling + coalesce (sort, dedup, sum duplicate edge_attr) ----
    # TODO(synk): coalesce has a data-dependent output size; kept on host.
    row, col = np.asarray(edge_index)
    row_p, col_p = row // 2, col // 2
    stride = max(n_pool,
                 int(row_p.max(initial=0)) + 1,
                 int(col_p.max(initial=0)) + 1, 1)
    lin = row_p.astype(np.int64) * stride + col_p.astype(np.int64)
    uniq, inv = np.unique(lin, return_inverse=True)
    edge_index_pooled = np.stack([uniq // stride, uniq % stride]).astype(row.dtype)
    ea = np.asarray(edge_attr)
    ea_out = np.zeros((uniq.shape[0],) + ea.shape[1:], dtype=ea.dtype)
    np.add.at(ea_out, inv.reshape(-1), ea)

    batch_pooled = batch_np[::2]
    return (x_pooled, jnp.asarray(edge_index_pooled),
            jnp.asarray(ea_out), jnp.asarray(batch_pooled))


if __name__ == "__main__":
    key = jax.random.PRNGKey(0)
    k1, k2, k3, k4 = jax.random.split(key, 4)

    B, nodes_per_graph, F = 2, 8, 32
    N = B * nodes_per_graph                       # 16 nodes total
    x = jax.random.normal(k1, (N, F), jnp.float32)
    batch = jnp.repeat(jnp.arange(B, dtype=jnp.int32), nodes_per_graph)

    # random intra-graph edges
    E = 24
    src = jax.random.randint(k2, (E,), 0, nodes_per_graph)
    dst = jax.random.randint(k3, (E,), 0, nodes_per_graph)
    goe = jnp.repeat(jnp.arange(B), E // B)
    edge_index = jnp.stack([src + goe * nodes_per_graph,
                            dst + goe * nodes_per_graph]).astype(jnp.int32)
    edge_attr = jax.random.normal(k4, (E, 4), jnp.float32)

    out = wave_pool(x, edge_index, edge_attr, batch)
    out = jax.block_until_ready(out)
    x_pooled, ei_pooled, ea_pooled, batch_pooled = out

    # sanity: shapes + numerical check of the kernel against a plain 2x2 avg pool
    assert x_pooled.shape == (N // 2, F // 2)
    ref = np.asarray(x).reshape(B, nodes_per_graph // 2, 2, F // 2, 2).mean(axis=(2, 4))
    ref = ref.reshape(-1, F // 2)
    assert np.allclose(np.asarray(x_pooled), ref, atol=1e-5)
    assert ei_pooled.shape[0] == 2 and batch_pooled.shape == (N // 2,)
    assert ea_pooled.shape[0] == ei_pooled.shape[1]

    print("KERNEL_OK")
</pallas_src>

<mosaic_0001>
module attributes {stable_mosaic.version = 11 : i64} {
  func.func @_wave_pool_kernel(%arg0: i32, %arg1: memref<2x8x256xf32, #tpu.memory_space<vmem>>, %arg2: memref<8x128xf32, #tpu.memory_space<vmem>>) attributes {dimension_semantics = [#tpu.dimension_semantics<parallel>], iteration_bounds = array<i64: 1>, scalar_prefetch = 0 : i64, scratch_operands = 0 : i64, tpu.core_type = #tpu.core_type<tc>, window_params = [{transform_indices = @transform_0, window_bounds = array<i64: 2, 8, 256>}, {transform_indices = @transform_1, window_bounds = array<i64: 8, 128>}]} {
    %c0 = arith.constant 0 : index
    %c0_0 = arith.constant 0 : index
    %c0_1 = arith.constant 0 : index
    %0 = vector.load %arg1[%c0, %c0_0, %c0_1] : memref<2x8x256xf32, #tpu.memory_space<vmem>>, vector<1x8x256xf32>
    %1 = vector.shape_cast %0 : vector<1x8x256xf32> to vector<8x256xf32>
    %c1 = arith.constant 1 : index
    %c0_2 = arith.constant 0 : index
    %c0_3 = arith.constant 0 : index
    %2 = vector.load %arg1[%c1, %c0_2, %c0_3] : memref<2x8x256xf32, #tpu.memory_space<vmem>>, vector<1x8x256xf32>
    %3 = vector.shape_cast %2 : vector<1x8x256xf32> to vector<8x256xf32>
    %4 = arith.addf %1, %3 : vector<8x256xf32>
    %5 = tpu.iota {dimensions = array<i32: 0>} : vector<256x128xi32>
    %6 = tpu.iota {dimensions = array<i32: 1>} : vector<256x128xi32>
    %c2_i32 = arith.constant 2 : i32
    %7 = vector.broadcast %c2_i32 : i32 to vector<256x128xi32>
    %8 = arith.muli %7, %6 : vector<256x128xi32>
    %9 = arith.cmpi eq, %5, %8 : vector<256x128xi32>
    %c2_i32_4 = arith.constant 2 : i32
    %10 = vector.broadcast %c2_i32_4 : i32 to vector<256x128xi32>
    %11 = arith.muli %10, %6 : vector<256x128xi32>
    %c1_i32 = arith.constant 1 : i32
    %12 = vector.broadcast %c1_i32 : i32 to vector<256x128xi32>
    %13 = arith.addi %11, %12 : vector<256x128xi32>
    %14 = arith.cmpi eq, %5, %13 : vector<256x128xi32>
    %15 = arith.ori %9, %14 : vector<256x128xi1>
    %cst = arith.constant 2.500000e-01 : f32
    %cst_5 = arith.constant 0.000000e+00 : f32
    %16 = vector.broadcast %cst : f32 to vector<256x128xf32>
    %17 = vector.broadcast %cst_5 : f32 to vector<256x128xf32>
    %18 = arith.select %15, %16, %17 : vector<256x128xi1>, vector<256x128xf32>
    %cst_6 = arith.constant dense<0.000000e+00> : vector<8x128xf32>
    %19 = tpu.matmul %4, %18, %cst_6 {dimension_numbers = #tpu.dot_dimension_numbers<[1], [0], [0], [1], [0, 0, 1, 1], [], []>} : vector<8x256xf32>, vector<256x128xf32>, vector<8x128xf32> -> vector<8x128xf32>
    %c0_7 = arith.constant 0 : index
    %c0_8 = arith.constant 0 : index
    %20 = vector.load %arg2[%c0_7, %c0_8] : memref<8x128xf32, #tpu.memory_space<vmem>>, vector<8x128xf32>
    tpu.vector_store %arg2[%c0_7, %c0_8], %19 {strides = array<i32>} : memref<8x128xf32, #tpu.memory_space<vmem>>, vector<8x128xf32>,
    return
  }
  func.func @transform_0(%arg0: i32) -> (i32, i32, i32) {
    %c0_i32 = arith.constant 0 : i32
    %c0_i32_0 = arith.constant 0 : i32
    %c0_i32_1 = arith.constant 0 : i32
    return %c0_i32, %arg0, %c0_i32_0 : i32, i32, i32
  }
  func.func @transform_1(%arg0: i32) -> (i32, i32) {
    %c0_i32 = arith.constant 0 : i32
    %c0_i32_0 = arith.constant 0 : i32
    return %arg0, %c0_i32 : i32, i32
  }
}

</mosaic_0001>

<llo_original>
// kernel: tpu_custom_call.1
$region0: #{tpu_custom_call.1}
  #allocation0 [shape = 'u32[]', space=smem, size = 0x4, offset = 0x4, fixed_abs, tag = 'smem constant byte address 0x4 - core index']
  #allocation1 [shape = 'u32[144,128]{1,0:T(1,128)}', space=vmem, size = 0x12000, scoped, tag = 'internal scratch']
  %s0 = inlined_call_operand.hbm [shape: f32[2,8,256], index: 0, kind: input, shape index: {}]
  %s1 = inlined_call_operand.hbm [shape: f32[8,128], index: 1, kind: output, shape index: {}]
  %s2 = sld [smem:[#allocation0]]
  $region18: #{tpu_custom_call.1} parent=0
    _
  %s4 = ssub.s32 1, %s2
  %s5 = scalar_select 0, %s4, %s2
  $region1: #{tpu_custom_call.1} parent=0
    #allocation2 [shape = 'u8[16384]{0}', space=vmem, size = 0x4000, scoped, tag = 'input window, operand 0, single buffered']
    #allocation3 [shape = 's32[1]{0}', space=sflag, size = 0x4, scoped, tag = 'scoped memory for tpu_custom_call.1']
    #allocation4 [shape = 's32[1]{0}', space=sflag, size = 0x4, scoped, tag = 'scoped memory for tpu_custom_call.1']
    #allocation5 [shape = 'u8[4096]{0}', space=vmem, size = 0x1000, scoped, tag = 'output window, operand 0, single buffered']
    %6 = vsyncpa [#allocation3], 0
    %7 = vsyncpa [#allocation4], 0
    // Predicated region
    $region2: #{tpu_custom_call.1} parent=1 // pred_check
      _
    $region3: #{tpu_custom_call.1} parent=1 // pred_check_branch
      %9 = sbr.rel (0) target = $region5
    $region4: #{tpu_custom_call.1} parent=1 // pred_region
      %s11 = ssub.s32 512, 512
      %12 = vsyncadd [#allocation3], %s11
      %s13 = sshll.u32 [#allocation2], 4
      %s14 = int_to_ptr.vmem [resolvable:$true] %s13
      %19 = dma.hbm_to_vmem [thread:$0]  %s0, 512, %s14, [#allocation3], 256, 256, 16
    $region5: #{tpu_custom_call.1} parent=1 // pred_fallthru
      _
    // Predicated region
    $region6: #{tpu_custom_call.1} parent=1 // pred_check
      _
    $region7: #{tpu_custom_call.1} parent=1 // pred_check_branch
      %21 = sbr.rel (0) target = $region9
    $region8: #{tpu_custom_call.1} parent=1 // pred_region
      %22 = dma.done [#allocation3], 512
    $region9: #{tpu_custom_call.1} parent=1 // pred_fallthru
      _
    %v23 = vld [vmem:[#allocation2] sm:$0xff]
    %v24 = vld [vmem:[#allocation2 + $0x8] sm:$0xff]
    %s25 = scalar_lea.vmem [#allocation2], 16
    %v26 = vld [vmem:[%s25] sm:$0xff]
    %v27 = vld [vmem:[%s25 + $0x8] sm:$0xff]
    %v28 = vadd.f32 %v23, %v26
    %v29 = vadd.f32 %v24, %v27
    %v30 = vlaneseq
    %v31 = vshrl.u32 %v30, 7
    %v32 = vadd.s32 %v31, 8
    %v33 = vadd.s32 %v31, 16
    %v34 = vadd.s32 %v31, 24
    %v35 = vadd.s32 %v31, 32
    %v36 = vadd.s32 %v31, 40
    %v37 = vadd.s32 %v31, 48
    %v38 = vadd.s32 %v31, 56
    %v39 = vadd.s32 %v31, 64
    %v40 = vadd.s32 %v31, 72
    %v41 = vadd.s32 %v31, 80
    %v42 = vadd.s32 %v31, 88
    %v43 = vadd.s32 %v31, 96
    %v44 = vadd.s32 %v31, 104
    %v45 = vadd.s32 %v31, 112
    %v46 = vadd.s32 %v31, 120
    %v47 = vadd.s32 %v31, 128
    %v48 = vadd.s32 %v31, 136
    %v49 = vadd.s32 %v31, 144
    %v50 = vadd.s32 %v31, 152
    %v51 = vadd.s32 %v31, 160
    %v52 = vadd.s32 %v31, 168
    %v53 = vadd.s32 %v31, 176
    %v54 = vadd.s32 %v31, 184
    %v55 = vadd.s32 %v31, 192
    %v56 = vadd.s32 %v31, 200
    %v57 = vadd.s32 %v31, 208
    %v58 = vadd.s32 %v31, 216
    %v59 = vadd.s32 %v31, 224
    %v60 = vadd.s32 %v31, 232
    %v61 = vadd.s32 %v31, 240
    %v62 = vadd.s32 %v31, 248
    %v63 = vlaneseq
    %v64 = vand.u32 %v63, 127
    %v65 = vmul.u32 %v64, 2
    %vm66 = vcmp.eq.s32.totalorder %v31, %v65
    %vm67 = vcmp.eq.s32.totalorder %v32, %v65
    %vm68 = vcmp.eq.s32.totalorder %v33, %v65
    %vm69 = vcmp.eq.s32.totalorder %v34, %v65
    %vm70 = vcmp.eq.s32.totalorder %v35, %v65
    %vm71 = vcmp.eq.s32.totalorder %v36, %v65
    %vm72 = vcmp.eq.s32.totalorder %v37, %v65
    %vm73 = vcmp.eq.s32.totalorder %v38, %v65
    %vm74 = vcmp.eq.s32.totalorder %v39, %v65
    %vm75 = vcmp.eq.s32.totalorder %v40, %v65
    %vm76 = vcmp.eq.s32.totalorder %v41, %v65
    %vm77 = vcmp.eq.s32.totalorder %v42, %v65
    %vm78 = vcmp.eq.s32.totalorder %v43, %v65
    %vm79 = vcmp.eq.s32.totalorder %v44, %v65
    %vm80 = vcmp.eq.s32.totalorder %v45, %v65
    %vm81 = vcmp.eq.s32.totalorder %v46, %v65
    %vm82 = vcmp.eq.s32.totalorder %v47, %v65
    %vm83 = vcmp.eq.s32.totalorder %v48, %v65
    %vm84 = vcmp.eq.s32.totalorder %v49, %v65
    %vm85 = vcmp.eq.s32.totalorder %v50, %v65
    %vm86 = vcmp.eq.s32.totalorder %v51, %v65
    %vm87 = vcmp.eq.s32.totalorder %v52, %v65
    %vm88 = vcmp.eq.s32.totalorder %v53, %v65
    %vm89 = vcmp.eq.s32.totalorder %v54, %v65
    %vm90 = vcmp.eq.s32.totalorder %v55, %v65
    %vm91 = vcmp.eq.s32.totalorder %v56, %v65
    %vm92 = vcmp.eq.s32.totalorder %v57, %v65
    %vm93 = vcmp.eq.s32.totalorder %v58, %v65
    %vm94 = vcmp.eq.s32.totalorder %v59, %v65
    %vm95 = vcmp.eq.s32.totalorder %v60, %v65
    %vm96 = vcmp.eq.s32.totalorder %v61, %v65
    %vm97 = vcmp.eq.s32.totalorder %v62, %v65
    %v98 = vadd.s32 %v65, 1
    %vm99 = vcmp.eq.s32.totalorder %v31, %v98
    %vm100 = vcmp.eq.s32.totalorder %v32, %v98
    %vm101 = vcmp.eq.s32.totalorder %v33, %v98
    %vm102 = vcmp.eq.s32.totalorder %v34, %v98
    %vm103 = vcmp.eq.s32.totalorder %v35, %v98
    %vm104 = vcmp.eq.s32.totalorder %v36, %v98
    %vm105 = vcmp.eq.s32.totalorder %v37, %v98
    %vm106 = vcmp.eq.s32.totalorder %v38, %v98
    %vm107 = vcmp.eq.s32.totalorder %v39, %v98
    %vm108 = vcmp.eq.s32.totalorder %v40, %v98
    %vm109 = vcmp.eq.s32.totalorder %v41, %v98
    %vm110 = vcmp.eq.s32.totalorder %v42, %v98
    %vm111 = vcmp.eq.s32.totalorder %v43, %v98
    %vm112 = vcmp.eq.s32.totalorder %v44, %v98
    %vm113 = vcmp.eq.s32.totalorder %v45, %v98
    %vm114 = vcmp.eq.s32.totalorder %v46, %v98
    %vm115 = vcmp.eq.s32.totalorder %v47, %v98
    %vm116 = vcmp.eq.s32.totalorder %v48, %v98
    %vm117 = vcmp.eq.s32.totalorder %v49, %v98
    %vm118 = vcmp.eq.s32.totalorder %v50, %v98
    %vm119 = vcmp.eq.s32.totalorder %v51, %v98
    %vm120 = vcmp.eq.s32.totalorder %v52, %v98
    %vm121 = vcmp.eq.s32.totalorder %v53, %v98
    %vm122 = vcmp.eq.s32.totalorder %v54, %v98
    %vm123 = vcmp.eq.s32.totalorder %v55, %v98
    %vm124 = vcmp.eq.s32.totalorder %v56, %v98
    %vm125 = vcmp.eq.s32.totalorder %v57, %v98
    %vm126 = vcmp.eq.s32.totalorder %v58, %v98
    %vm127 = vcmp.eq.s32.totalorder %v59, %v98
    %vm128 = vcmp.eq.s32.totalorder %v60, %v98
    %vm129 = vcmp.eq.s32.totalorder %v61, %v98
    %vm130 = vcmp.eq.s32.totalorder %v62, %v98
    %vm131 = vmor %vm66, %vm99
    %vm132 = vmor %vm67, %vm100
    %vm133 = vmor %vm68, %vm101
    %vm134 = vmor %vm69, %vm102
    %vm135 = vmor %vm70, %vm103
    %vm136 = vmor %vm71, %vm104
    %vm137 = vmor %vm72, %vm105
    %vm138 = vmor %vm73, %vm106
    %vm139 = vmor %vm74, %vm107
    %vm140 = vmor %vm75, %vm108
    %vm141 = vmor %vm76, %vm109
    %vm142 = vmor %vm77, %vm110
    %vm143 = vmor %vm78, %vm111
    %vm144 = vmor %vm79, %vm112
    %vm145 = vmor %vm80, %vm113
    %vm146 = vmor %vm81, %vm114
    %vm147 = vmor %vm82, %vm115
    %vm148 = vmor %vm83, %vm116
    %vm149 = vmor %vm84, %vm117
    %vm150 = vmor %vm85, %vm118
    %vm151 = vmor %vm86, %vm119
    %vm152 = vmor %vm87, %vm120
    %vm153 = vmor %vm88, %vm121
    %vm154 = vmor %vm89, %vm122
    %vm155 = vmor %vm90, %vm123
    %vm156 = vmor %vm91, %vm124
    %vm157 = vmor %vm92, %vm125
    %vm158 = vmor %vm93, %vm126
    %vm159 = vmor %vm94, %vm127
    %vm160 = vmor %vm95, %vm128
    %vm161 = vmor %vm96, %vm129
    %vm162 = vmor %vm97, %vm130
    %v163 = vsel %vm131, 0.25, 0.0
    %v164 = vsel %vm132, 0.25, 0.0
    %v165 = vsel %vm133, 0.25, 0.0
    %v166 = vsel %vm134, 0.25, 0.0
    %v167 = vsel %vm135, 0.25, 0.0
    %v168 = vsel %vm136, 0.25, 0.0
    %v169 = vsel %vm137, 0.25, 0.0
    %v170 = vsel %vm138, 0.25, 0.0
    %v171 = vsel %vm139, 0.25, 0.0
    %v172 = vsel %vm140, 0.25, 0.0
    %v173 = vsel %vm141, 0.25, 0.0
    %v174 = vsel %vm142, 0.25, 0.0
    %v175 = vsel %vm143, 0.25, 0.0
    %v176 = vsel %vm144, 0.25, 0.0
    %v177 = vsel %vm145, 0.25, 0.0
    %v178 = vsel %vm146, 0.25, 0.0
    %v179 = vsel %vm147, 0.25, 0.0
    %v180 = vsel %vm148, 0.25, 0.0
    %v181 = vsel %vm149, 0.25, 0.0
    %v182 = vsel %vm150, 0.25, 0.0
    %v183 = vsel %vm151, 0.25, 0.0
    %v184 = vsel %vm152, 0.25, 0.0
    %v185 = vsel %vm153, 0.25, 0.0
    %v186 = vsel %vm154, 0.25, 0.0
    %v187 = vsel %vm155, 0.25, 0.0
    %v188 = vsel %vm156, 0.25, 0.0
    %v189 = vsel %vm157, 0.25, 0.0
    %v190 = vsel %vm158, 0.25, 0.0
    %v191 = vsel %vm159, 0.25, 0.0
    %v192 = vsel %vm160, 0.25, 0.0
    %v193 = vsel %vm161, 0.25, 0.0
    %v194 = vsel %vm162, 0.25, 0.0
    %195 = vmatprep.subr.mxu0 0.0
    %196 = vmatpush1.msra.mxu0 %v178
    %197 = vmatprep.subr.mxu0 0.0
    %198 = vmatpush1.msra.mxu0 %v177
    %199 = vmatprep.subr.mxu0 0.0
    %200 = vmatpush1.msra.mxu0 %v176
    %201 = vmatprep.subr.mxu0 0.0
    %202 = vmatpush1.msra.mxu0 %v175
    %203 = vmatprep.subr.mxu0 0.0
    %204 = vmatpush1.msra.mxu0 %v174
    %205 = vmatprep.subr.mxu0 0.0
    %206 = vmatpush1.msra.mxu0 %v173
    %207 = vmatprep.subr.mxu0 0.0
    %208 = vmatpush1.msra.mxu0 %v172
    %209 = vmatprep.subr.mxu0 0.0
    %210 = vmatpush1.msra.mxu0 %v171
    %211 = vmatprep.subr.mxu0 0.0
    %212 = vmatpush1.msra.mxu0 %v170
    %213 = vmatprep.subr.mxu0 0.0
    %214 = vmatpush1.msra.mxu0 %v169
    %215 = vmatprep.subr.mxu0 0.0
    %216 = vmatpush1.msra.mxu0 %v168
    %217 = vmatprep.subr.mxu0 0.0
    %218 = vmatpush1.msra.mxu0 %v167
    %219 = vmatprep.subr.mxu0 0.0
    %220 = vmatpush1.msra.mxu0 %v166
    %221 = vmatprep.subr.mxu0 0.0
    %222 = vmatpush1.msra.mxu0 %v165
    %223 = vmatprep.subr.mxu0 0.0
    %224 = vmatpush1.msra.mxu0 %v164
    %225 = vmatprep.subr.mxu0 0.0
    %226 = vmatpush1.msra.mxu0 %v163
    %227 = vmatprep.subr.mxu0 0.0
    %228 = vmatpush2.msra.mxu0 %v194
    %229 = vmatprep.subr.mxu0 0.0
    %230 = vmatpush2.msra.mxu0 %v193
    %231 = vmatprep.subr.mxu0 0.0
    %232 = vmatpush2.msra.mxu0 %v192
    %233 = vmatprep.subr.mxu0 0.0
    %234 = vmatpush2.msra.mxu0 %v191
    %235 = vmatprep.subr.mxu0 0.0
    %236 = vmatpush2.msra.mxu0 %v190
    %237 = vmatprep.subr.mxu0 0.0
    %238 = vmatpush2.msra.mxu0 %v189
    %239 = vmatprep.subr.mxu0 0.0
    %240 = vmatpush2.msra.mxu0 %v188
    %241 = vmatprep.subr.mxu0 0.0
    %242 = vmatpush2.msra.mxu0 %v187
    %243 = vmatprep.subr.mxu0 0.0
    %244 = vmatpush2.msra.mxu0 %v186
    %245 = vmatprep.subr.mxu0 0.0
    %246 = vmatpush2.msra.mxu0 %v185
    %247 = vmatprep.subr.mxu0 0.0
    %248 = vmatpush2.msra.mxu0 %v184
    %249 = vmatprep.subr.mxu0 0.0
    %250 = vmatpush2.msra.mxu0 %v183
    %251 = vmatprep.subr.mxu0 0.0
    %252 = vmatpush2.msra.mxu0 %v182
    %253 = vmatprep.subr.mxu0 0.0
    %254 = vmatpush2.msra.mxu0 %v181
    %255 = vmatprep.subr.mxu0 0.0
    %256 = vmatpush2.msra.mxu0 %v180
    %257 = vmatprep.subr.mxu0 0.0
    %258 = vmatpush2.msra.mxu0 %v179
    %259 = vmatprep.mubr.f32.mxu0 %v29
    %260 = vmatmul.mubr.f32.gmra.mxu0 %v28
    %v261 = vpop.f32.mrf.mxu0
    %v262 = vadd.f32 0.0, %v261
    %v263 = vpop.f32.mrf.mxu0
    %264 = vdwg.mxu0
    %265 = vst [vmem:[#allocation5] sm:$0xff] %v262
    // Predicated region
    $region10: #{tpu_custom_call.1} parent=1 // pred_check
      _
    $region11: #{tpu_custom_call.1} parent=1 // pred_check_branch
      %267 = sbr.rel (0) target = $region13
    $region12: #{tpu_custom_call.1} parent=1 // pred_region
      %s269 = ssub.s32 128, 128
      %270 = vsyncadd [#allocation4], %s269
      %s272 = sshll.u32 [#allocation5], 4
      %s273 = int_to_ptr.vmem [resolvable:$true] %s272
      %275 = dma.vmem_to_hbm [thread:$0]  %s273, 128, %s1, [#allocation4]
    $region13: #{tpu_custom_call.1} parent=1 // pred_fallthru
      _
    // Predicated region
    $region14: #{tpu_custom_call.1} parent=1 // pred_check
      _
    $region15: #{tpu_custom_call.1} parent=1 // pred_check_branch
      %277 = sbr.rel (0) target = $region17
    $region16: #{tpu_custom_call.1} parent=1 // pred_region
      %278 = dma.done [#allocation4], 128
    $region17: #{tpu_custom_call.1} parent=1 // pred_fallthru
      _
    %279 = vsyncpa [#allocation3], 1
    %280 = vsyncpa [#allocation4], 1

</llo_original>
